<compile_context>
chip_gen: v7x
topology: tpu7x:2x2x1
jax: 0.10.0
libtpu: 0.0.40
codegen_flags: <defaults>
</compile_context>

<pallas_src>
import numpy as np
import jax
import jax.numpy as jnp
from jax.experimental import pallas as pl
from jax.experimental.pallas import tpu as pltpu

# Small, module-consistent shapes: in_size = C, in_height = H = W.
B, C, H, W = 2, 8, 16, 16
CR = C // 4          # hidden width of the shared MLP


# ---------------------------------------------------------------------------
# Fused channel-attention kernel (one batch element per grid step).
#   x_ref   : (C, HW)  VMEM   (lane-dense: HW = 256)
#   w1t_ref : (CR, C)  VMEM   (Linear1 weight, pre-transposed)
#   b1_ref  : (CR, 1)  VMEM
#   w2t_ref : (C, CR)  VMEM   (Linear2 weight, pre-transposed)
#   b2_ref  : (C, 1)   VMEM
#   out_ref : (C, HW)  VMEM   (x scaled per-channel)
# ---------------------------------------------------------------------------
def channel_attention_kernel(x_ref, w1t_ref, b1_ref, w2t_ref, b2_ref, out_ref):
    x = x_ref[...]                                        # (C, HW)

    # Global avg / max pooling along the lane axis.
    avg = jnp.mean(x, axis=-1, keepdims=True)             # (C, 1)
    mx = jnp.max(x, axis=-1, keepdims=True)               # (C, 1)

    # Pack both pooled vectors into one operand and run the shared MLP once.
    pooled = jnp.concatenate([avg, mx], axis=1)           # (C, 2)
    h = jnp.dot(w1t_ref[...], pooled,
                preferred_element_type=jnp.float32) + b1_ref[...]   # (CR, 2)
    h = jnp.maximum(h, 0.0)
    o = jnp.dot(w2t_ref[...], h,
                preferred_element_type=jnp.float32) + b2_ref[...]   # (C, 2)

    # sigmoid(mlp(avg) + mlp(max)) -> per-channel scale (EUP logistic).
    scale = jax.nn.sigmoid(o[:, 0:1] + o[:, 1:2])         # (C, 1)

    # Lane-dense broadcast multiply + store.
    out_ref[...] = x * scale


def channel_attention(x, w1, b1, w2, b2):
    """x: (B, C, H, W) float32; w1: (C, CR); b1: (CR,); w2: (CR, C); b2: (C,)."""
    B_, C_, H_, W_ = x.shape
    HW = H_ * W_
    CR_ = w1.shape[1]

    x_flat = x.reshape(B_, C_, HW)              # lane-dense layout
    w1t = w1.T.astype(jnp.float32)              # (CR, C)
    w2t = w2.T.astype(jnp.float32)              # (C, CR)
    b1c = b1.reshape(CR_, 1).astype(jnp.float32)
    b2c = b2.reshape(C_, 1).astype(jnp.float32)

    out = pl.pallas_call(
        channel_attention_kernel,
        out_shape=jax.ShapeDtypeStruct((B_, C_, HW), jnp.float32),
        grid=(B_,),
        in_specs=[
            pl.BlockSpec((None, C_, HW), lambda b: (b, 0, 0)),
            pl.BlockSpec((CR_, C_), lambda b: (0, 0)),
            pl.BlockSpec((CR_, 1), lambda b: (0, 0)),
            pl.BlockSpec((C_, CR_), lambda b: (0, 0)),
            pl.BlockSpec((C_, 1), lambda b: (0, 0)),
        ],
        out_specs=pl.BlockSpec((None, C_, HW), lambda b: (b, 0, 0)),
        compiler_params=pltpu.CompilerParams(
            dimension_semantics=("parallel",)),
    )(x_flat, w1t, b1c, w2t, b2c)
    return out.reshape(B_, C_, H_, W_)


# ---------------------------------------------------------------------------
# Pure-JAX reference for verification.
# ---------------------------------------------------------------------------
def reference_forward(x, p):
    avg = jnp.mean(x, axis=(2, 3))                        # AvgPool2d(H) + Flatten
    mx = jnp.max(x, axis=(2, 3))                          # MaxPool2d(H) + Flatten

    def mlp(v):
        return jnp.maximum(v @ p["w1"] + p["b1"], 0.0) @ p["w2"] + p["b2"]

    scale = jax.nn.sigmoid(mlp(avg) + mlp(mx))            # (B, C)
    return x * scale[:, :, None, None]


if __name__ == "__main__":
    key = jax.random.PRNGKey(0)
    kx, k1, k2, k3, k4 = jax.random.split(key, 5)

    x = jax.random.normal(kx, (B, C, H, W), jnp.float32)

    # Deterministic synthetic parameters (shapes from the module's __init__).
    params = {
        "w1": jax.random.normal(k1, (C, CR), jnp.float32) * 0.3,   # Linear(C, C//4)
        "b1": jax.random.normal(k2, (CR,), jnp.float32) * 0.1,
        "w2": jax.random.normal(k3, (CR, C), jnp.float32) * 0.3,   # Linear(C//4, C)
        "b2": jax.random.normal(k4, (C,), jnp.float32) * 0.1,
    }

    y = channel_attention(x, params["w1"], params["b1"], params["w2"], params["b2"])
    y = jax.block_until_ready(y)

    ref = reference_forward(x, params)
    np.testing.assert_allclose(np.asarray(y), np.asarray(ref), rtol=1e-4, atol=1e-5)

    print("KERNEL_OK")
</pallas_src>

<mosaic_0001>
module attributes {stable_mosaic.version = 11 : i64} {
  func.func @channel_attention_kernel(%arg0: i32, %arg1: memref<1x8x256xf32, #tpu.memory_space<vmem>>, %arg2: memref<2x8xf32, #tpu.memory_space<vmem>>, %arg3: memref<2x1xf32, #tpu.memory_space<vmem>>, %arg4: memref<8x2xf32, #tpu.memory_space<vmem>>, %arg5: memref<8x1xf32, #tpu.memory_space<vmem>>, %arg6: memref<1x8x256xf32, #tpu.memory_space<vmem>>) attributes {dimension_semantics = [#tpu.dimension_semantics<parallel>], iteration_bounds = array<i64: 2>, scalar_prefetch = 0 : i64, scratch_operands = 0 : i64, tpu.core_type = #tpu.core_type<tc>, window_params = [{transform_indices = @transform_0, window_bounds = array<i64: 1, 8, 256>}, {pipeline_mode = #tpu.pipeline_mode<synchronous>, transform_indices = @transform_1, window_bounds = array<i64: 2, 8>}, {pipeline_mode = #tpu.pipeline_mode<synchronous>, transform_indices = @transform_2, window_bounds = array<i64: 2, 1>}, {pipeline_mode = #tpu.pipeline_mode<synchronous>, transform_indices = @transform_3, window_bounds = array<i64: 8, 2>}, {pipeline_mode = #tpu.pipeline_mode<synchronous>, transform_indices = @transform_4, window_bounds = array<i64: 8, 1>}, {transform_indices = @transform_5, window_bounds = array<i64: 1, 8, 256>}]} {
    %c0 = arith.constant 0 : index
    %c0_0 = arith.constant 0 : index
    %c0_1 = arith.constant 0 : index
    %0 = vector.load %arg1[%c0, %c0_0, %c0_1] : memref<1x8x256xf32, #tpu.memory_space<vmem>>, vector<1x8x256xf32>
    %1 = vector.shape_cast %0 : vector<1x8x256xf32> to vector<8x256xf32>
    %cst = arith.constant dense<0.000000e+00> : vector<8xf32>
    %2 = vector.multi_reduction <add>, %1, %cst [1] : vector<8x256xf32> to vector<8xf32>
    %3 = vector.shape_cast %2 : vector<8xf32> to vector<8x1xf32>
    %cst_2 = arith.constant 2.560000e+02 : f32
    %4 = vector.broadcast %cst_2 : f32 to vector<8x1xf32>
    %5 = arith.divf %3, %4 : vector<8x1xf32>
    %cst_3 = arith.constant dense<0xFF800000> : vector<8xf32>
    %6 = vector.multi_reduction <maximumf>, %1, %cst_3 [1] : vector<8x256xf32> to vector<8xf32>
    %7 = vector.shape_cast %6 : vector<8xf32> to vector<8x1xf32>
    %8 = tpu.concatenate %5, %7 in 1 : vector<8x1xf32>, vector<8x1xf32> -> vector<8x2xf32>
    %c0_4 = arith.constant 0 : index
    %c0_5 = arith.constant 0 : index
    %9 = vector.load %arg2[%c0_4, %c0_5] : memref<2x8xf32, #tpu.memory_space<vmem>>, vector<2x8xf32>
    %cst_6 = arith.constant dense<0.000000e+00> : vector<2x2xf32>
    %10 = tpu.matmul %9, %8, %cst_6 {dimension_numbers = #tpu.dot_dimension_numbers<[1], [0], [0], [1], [0, 0, 1, 1], [], []>} : vector<2x8xf32>, vector<8x2xf32>, vector<2x2xf32> -> vector<2x2xf32>
    %c0_7 = arith.constant 0 : index
    %c0_8 = arith.constant 0 : index
    %11 = vector.load %arg3[%c0_7, %c0_8] : memref<2x1xf32, #tpu.memory_space<vmem>>, vector<2x1xf32>
    %12 = vector.broadcast %11 : vector<2x1xf32> to vector<2x2xf32>
    %13 = arith.addf %10, %12 : vector<2x2xf32>
    %cst_9 = arith.constant 0.000000e+00 : f32
    %14 = vector.broadcast %cst_9 : f32 to vector<2x2xf32>
    %15 = arith.maximumf %13, %14 : vector<2x2xf32>
    %c0_10 = arith.constant 0 : index
    %c0_11 = arith.constant 0 : index
    %16 = vector.load %arg4[%c0_10, %c0_11] : memref<8x2xf32, #tpu.memory_space<vmem>>, vector<8x2xf32>
    %cst_12 = arith.constant dense<0.000000e+00> : vector<8x2xf32>
    %17 = tpu.matmul %16, %15, %cst_12 {dimension_numbers = #tpu.dot_dimension_numbers<[1], [0], [0], [1], [0, 0, 1, 1], [], []>} : vector<8x2xf32>, vector<2x2xf32>, vector<8x2xf32> -> vector<8x2xf32>
    %c0_13 = arith.constant 0 : index
    %c0_14 = arith.constant 0 : index
    %18 = vector.load %arg5[%c0_13, %c0_14] : memref<8x1xf32, #tpu.memory_space<vmem>>, vector<8x1xf32>
    %19 = vector.broadcast %18 : vector<8x1xf32> to vector<8x2xf32>
    %20 = arith.addf %17, %19 : vector<8x2xf32>
    %21 = vector.extract_strided_slice %20 {offsets = [0, 0], sizes = [8, 1], strides = [1, 1]} : vector<8x2xf32> to vector<8x1xf32>
    %22 = vector.extract_strided_slice %20 {offsets = [0, 1], sizes = [8, 1], strides = [1, 1]} : vector<8x2xf32> to vector<8x1xf32>
    %23 = arith.addf %21, %22 : vector<8x1xf32>
    %24 = arith.negf %23 : vector<8x1xf32>
    %25 = math.exp %24 : vector<8x1xf32>
    %cst_15 = arith.constant 1.000000e+00 : f32
    %26 = vector.broadcast %cst_15 : f32 to vector<8x1xf32>
    %27 = arith.addf %26, %25 : vector<8x1xf32>
    %28 = arith.divf %26, %27 : vector<8x1xf32>
    %29 = vector.broadcast %28 : vector<8x1xf32> to vector<8x256xf32>
    %30 = arith.mulf %1, %29 : vector<8x256xf32>
    %c0_16 = arith.constant 0 : index
    %c0_17 = arith.constant 0 : index
    %c0_18 = arith.constant 0 : index
    %31 = vector.load %arg6[%c0_16, %c0_17, %c0_18] : memref<1x8x256xf32, #tpu.memory_space<vmem>>, vector<1x8x256xf32>
    %32 = vector.shape_cast %31 : vector<1x8x256xf32> to vector<8x256xf32>
    %33 = vector.shape_cast %30 : vector<8x256xf32> to vector<1x8x256xf32>
    tpu.vector_store %arg6[%c0_16, %c0_17, %c0_18], %33 {strides = array<i32>} : memref<1x8x256xf32, #tpu.memory_space<vmem>>, vector<1x8x256xf32>,
    return
  }
  func.func @transform_0(%arg0: i32) -> (i32, i32, i32) {
    %c0_i32 = arith.constant 0 : i32
    %c0_i32_0 = arith.constant 0 : i32
    %c0_i32_1 = arith.constant 0 : i32
    return %arg0, %c0_i32, %c0_i32_0 : i32, i32, i32
  }
  func.func @transform_1(%arg0: i32) -> (i32, i32) {
    %c0_i32 = arith.constant 0 : i32
    %c0_i32_0 = arith.constant 0 : i32
    %c0_i32_1 = arith.constant 0 : i32
    return %c0_i32, %c0_i32_0 : i32, i32
  }
  func.func @transform_2(%arg0: i32) -> (i32, i32) {
    %c0_i32 = arith.constant 0 : i32
    %c0_i32_0 = arith.constant 0 : i32
    %c0_i32_1 = arith.constant 0 : i32
    return %c0_i32, %c0_i32_0 : i32, i32
  }
  func.func @transform_3(%arg0: i32) -> (i32, i32) {
    %c0_i32 = arith.constant 0 : i32
    %c0_i32_0 = arith.constant 0 : i32
    %c0_i32_1 = arith.constant 0 : i32
    return %c0_i32, %c0_i32_0 : i32, i32
  }
  func.func @transform_4(%arg0: i32) -> (i32, i32) {
    %c0_i32 = arith.constant 0 : i32
    %c0_i32_0 = arith.constant 0 : i32
    %c0_i32_1 = arith.constant 0 : i32
    return %c0_i32, %c0_i32_0 : i32, i32
  }
  func.func @transform_5(%arg0: i32) -> (i32, i32, i32) {
    %c0_i32 = arith.constant 0 : i32
    %c0_i32_0 = arith.constant 0 : i32
    %c0_i32_1 = arith.constant 0 : i32
    return %arg0, %c0_i32, %c0_i32_0 : i32, i32, i32
  }
}

</mosaic_0001>

<llo_original>
// kernel: tpu_custom_call.1
$region0: #{tpu_custom_call.1}
  #allocation0 [shape = 'u32[]', space=smem, size = 0x4, offset = 0x4, fixed_abs, tag = 'smem constant byte address 0x4 - core index']
  #allocation1 [shape = 'u32[144,128]{1,0:T(1,128)}', space=vmem, size = 0x12000, scoped, tag = 'internal scratch']
  %s0 = inlined_call_operand.hbm [shape: f32[2,8,256], index: 0, kind: input, shape index: {}]
  %s1 = inlined_call_operand.vmem [shape: f32[2,8], index: 1, kind: input, shape index: {}]
  %s2 = inlined_call_operand.vmem [shape: f32[2,1], index: 2, kind: input, shape index: {}]
  %s3 = inlined_call_operand.vmem [shape: f32[8,2], index: 3, kind: input, shape index: {}]
  %s4 = inlined_call_operand.vmem [shape: f32[8,1], index: 4, kind: input, shape index: {}]
  %s5 = inlined_call_operand.hbm [shape: f32[2,8,256], index: 5, kind: output, shape index: {}]
  %s6 = sld [smem:[#allocation0]]
  $region57: #{tpu_custom_call.1} parent=0
    _
  %s8 = ssub.s32 1, %s6
  %s9 = scalar_select 0, %s8, %s6
  $region1: #{tpu_custom_call.1} parent=0
    #allocation2 [shape = 'u8[16384]{0}', space=vmem, size = 0x4000, scoped, tag = 'input window, operand 0']
    #allocation3 [shape = 's32[2]{0}', space=sflag, size = 0x8, scoped, tag = 'scoped memory for tpu_custom_call.1']
    #allocation4 [shape = 's32[2]{0}', space=sflag, size = 0x8, scoped, tag = 'scoped memory for tpu_custom_call.1']
    #allocation5 [shape = 'u8[16384]{0}', space=vmem, size = 0x4000, scoped, tag = 'output window, operand 0']
    %10 = vsyncpa [#allocation3], 0
    %s11 = scalar_lea.sflag [#allocation3], 1
    %12 = vsyncpa %s11, 0
    %13 = vsyncpa [#allocation4], 0
    %s14 = scalar_lea.sflag [#allocation4], 1
    %15 = vsyncpa %s14, 0
    loop: start=0, step=1, limit=4
    $region2: #{tpu_custom_call.1} parent=1 // loop_pre_header
      _
    $region3: #{tpu_custom_call.1} parent=1 // loop_header
      %s17 = sphi 0, %s21
      %p18 = scmp.ge.s32.totalorder %s17, 4
      %s27 = sphi 0, %s29
      %s30 = sphi 0, %s27
      %s31 = sphi 0, %s30
      %s47 = sphi 0, %s31
      %s51 = sphi 0, %s51
      %s53 = sphi 0, %s51
      %s54 = sphi 0, %s53
      %s68 = sphi 0, %s54
      %s72 = sphi 0, %s72
      %s74 = sphi 0, %s72
      %s75 = sphi 0, %s74
      %s89 = sphi 0, %s75
      %s93 = sphi 0, %s93
      %s95 = sphi 0, %s93
      %s96 = sphi 0, %s95
      %s110 = sphi 0, %s96
      %s114 = sphi 0, %s114
      %s116 = sphi 0, %s114
      %s117 = sphi 0, %s116
      %s131 = sphi 0, %s117
      %s137 = sphi 0, %s139
      %s140 = sphi 0, %s137
      %s141 = sphi 0, %s140
      %s157 = sphi 0, %s141
    $region4: #{tpu_custom_call.1} parent=1 // loop_header_branch
      %20 = sbr.rel (%p18) target = $region8
    $region5: #{tpu_custom_call.1} parent=1 // loop_body
      %s22 = ssub.s32 %s17, 1
      %s23 = ssub.s32 %s17, 2
      %s24 = sadd.s32 %s17, 1
      %s25 = ssub.s32 %s17, %s24
      %p26 = scmp.eq.s32.totalorder %s25, 0
      %s28 = sadd.s32 %s27, 1
      %s29 = scalar_select %p26, %s27, %s28
      %p32 = pneg %p26
      %p33 = scmp.eq.s32.totalorder %s17, 1
      %p34 = por %p32, %p33
      %p35 = scmp.ne.s32.totalorder %s27, %s30
      %p36 = scmp.eq.s32.totalorder %s17, 0
      %p37 = por %p35, %p36
      %p38 = scmp.ne.s32.totalorder %s27, %s30
      %p39 = scmp.eq.s32.totalorder %s22, 1
      %p40 = por %p38, %p39
      %p41 = scmp.ne.s32.totalorder %s30, %s31
      %p42 = scmp.eq.s32.totalorder %s22, 0
      %p43 = por %p41, %p42
      %p44 = scmp.ne.s32.totalorder %s30, %s31
      %p45 = scmp.eq.s32.totalorder %s23, 1
      %p46 = por %p44, %p45
      %p48 = scmp.ne.s32.totalorder %s31, %s47
      %p49 = scmp.eq.s32.totalorder %s23, 0
      %p50 = por %p48, %p49
      %s52 = sadd.s32 %s51, 1
      %p55 = scmp.eq.s32.totalorder %s17, 1
      %p56 = scmp.ne.s32.totalorder %s51, %s53
      %p57 = scmp.eq.s32.totalorder %s17, 0
      %p58 = por %p56, %p57
      %p59 = scmp.ne.s32.totalorder %s51, %s53
      %p60 = scmp.eq.s32.totalorder %s22, 1
      %p61 = por %p59, %p60
      %p62 = scmp.ne.s32.totalorder %s53, %s54
      %p63 = scmp.eq.s32.totalorder %s22, 0
      %p64 = por %p62, %p63
      %p65 = scmp.ne.s32.totalorder %s53, %s54
      %p66 = scmp.eq.s32.totalorder %s23, 1
      %p67 = por %p65, %p66
      %p69 = scmp.ne.s32.totalorder %s54, %s68
      %p70 = scmp.eq.s32.totalorder %s23, 0
      %p71 = por %p69, %p70
      %s73 = sadd.s32 %s72, 1
      %p76 = scmp.eq.s32.totalorder %s17, 1
      %p77 = scmp.ne.s32.totalorder %s72, %s74
      %p78 = scmp.eq.s32.totalorder %s17, 0
      %p79 = por %p77, %p78
      %p80 = scmp.ne.s32.totalorder %s72, %s74
      %p81 = scmp.eq.s32.totalorder %s22, 1
      %p82 = por %p80, %p81
      %p83 = scmp.ne.s32.totalorder %s74, %s75
      %p84 = scmp.eq.s32.totalorder %s22, 0
      %p85 = por %p83, %p84
      %p86 = scmp.ne.s32.totalorder %s74, %s75
      %p87 = scmp.eq.s32.totalorder %s23, 1
      %p88 = por %p86, %p87
      %p90 = scmp.ne.s32.totalorder %s75, %s89
      %p91 = scmp.eq.s32.totalorder %s23, 0
      %p92 = por %p90, %p91
      %s94 = sadd.s32 %s93, 1
      %p97 = scmp.eq.s32.totalorder %s17, 1
      %p98 = scmp.ne.s32.totalorder %s93, %s95
      %p99 = scmp.eq.s32.totalorder %s17, 0
      %p100 = por %p98, %p99
      %p101 = scmp.ne.s32.totalorder %s93, %s95
      %p102 = scmp.eq.s32.totalorder %s22, 1
      %p103 = por %p101, %p102
      %p104 = scmp.ne.s32.totalorder %s95, %s96
      %p105 = scmp.eq.s32.totalorder %s22, 0
      %p106 = por %p104, %p105
      %p107 = scmp.ne.s32.totalorder %s95, %s96
      %p108 = scmp.eq.s32.totalorder %s23, 1
      %p109 = por %p107, %p108
      %p111 = scmp.ne.s32.totalorder %s96, %s110
      %p112 = scmp.eq.s32.totalorder %s23, 0
      %p113 = por %p111, %p112
      %s115 = sadd.s32 %s114, 1
      %p118 = scmp.eq.s32.totalorder %s17, 1
      %p119 = scmp.ne.s32.totalorder %s114, %s116
      %p120 = scmp.eq.s32.totalorder %s17, 0
      %p121 = por %p119, %p120
      %p122 = scmp.ne.s32.totalorder %s114, %s116
      %p123 = scmp.eq.s32.totalorder %s22, 1
      %p124 = por %p122, %p123
      %p125 = scmp.ne.s32.totalorder %s116, %s117
      %p126 = scmp.eq.s32.totalorder %s22, 0
      %p127 = por %p125, %p126
      %p128 = scmp.ne.s32.totalorder %s116, %s117
      %p129 = scmp.eq.s32.totalorder %s23, 1
      %p130 = por %p128, %p129
      %p132 = scmp.ne.s32.totalorder %s117, %s131
      %p133 = scmp.eq.s32.totalorder %s23, 0
      %p134 = por %p132, %p133
      %s135 = ssub.s32 %s17, %s24
      %p136 = scmp.eq.s32.totalorder %s135, 0
      %s138 = sadd.s32 %s137, 1
      %s139 = scalar_select %p136, %s137, %s138
      %p142 = pneg %p136
      %p143 = scmp.eq.s32.totalorder %s17, 1
      %p144 = por %p142, %p143
      %p145 = scmp.ne.s32.totalorder %s137, %s140
      %p146 = scmp.eq.s32.totalorder %s17, 0
      %p147 = por %p145, %p146
      %p148 = scmp.ne.s32.totalorder %s137, %s140
      %p149 = scmp.eq.s32.totalorder %s22, 1
      %p150 = por %p148, %p149
      %p151 = scmp.ne.s32.totalorder %s140, %s141
      %p152 = scmp.eq.s32.totalorder %s22, 0
      %p153 = por %p151, %p152
      %p154 = scmp.ne.s32.totalorder %s140, %s141
      %p155 = scmp.eq.s32.totalorder %s23, 1
      %p156 = por %p154, %p155
      %p158 = scmp.ne.s32.totalorder %s141, %s157
      %p159 = scmp.eq.s32.totalorder %s23, 0
      %p160 = por %p158, %p159
      %p161 = scmp.le.s32.totalorder 1, %s17
      %p162 = scmp.lt.s32.totalorder %s17, 3
      %p163 = pnand %p161, %p162
      %p164 = pneg %p163
      // Predicated region
      $region9: #{tpu_custom_call.1} parent=5 // pred_check
        _
      $region10: #{tpu_custom_call.1} parent=5 // pred_check_branch
        %166 = sbr.rel (%p163) target = $region12
      $region11: #{tpu_custom_call.1} parent=5 // pred_region
        %s167 = ssub.s32 %s17, 1
        // Predicated region
        $region13: #{tpu_custom_call.1} parent=11 // pred_check
          %p168 = pneg %p64
        $region14: #{tpu_custom_call.1} parent=11 // pred_check_branch
          %170 = sbr.rel (%p168) target = $region16
        $region15: #{tpu_custom_call.1} parent=11 // pred_region
          _
        $region16: #{tpu_custom_call.1} parent=11 // pred_fallthru
          _
        // Predicated region
        $region17: #{tpu_custom_call.1} parent=11 // pred_check
          %p171 = pneg %p85
        $region18: #{tpu_custom_call.1} parent=11 // pred_check_branch
          %173 = sbr.rel (%p171) target = $region20
        $region19: #{tpu_custom_call.1} parent=11 // pred_region
          _
        $region20: #{tpu_custom_call.1} parent=11 // pred_fallthru
          _
        // Predicated region
        $region21: #{tpu_custom_call.1} parent=11 // pred_check
          %p174 = pneg %p106
        $region22: #{tpu_custom_call.1} parent=11 // pred_check_branch
          %176 = sbr.rel (%p174) target = $region24
        $region23: #{tpu_custom_call.1} parent=11 // pred_region
          _
        $region24: #{tpu_custom_call.1} parent=11 // pred_fallthru
          _
        // Predicated region
        $region25: #{tpu_custom_call.1} parent=11 // pred_check
          %p177 = pneg %p127
        $region26: #{tpu_custom_call.1} parent=11 // pred_check_branch
          %179 = sbr.rel (%p177) target = $region28
        $region27: #{tpu_custom_call.1} parent=11 // pred_region
          _
        $region28: #{tpu_custom_call.1} parent=11 // pred_fallthru
          _
      $region12: #{tpu_custom_call.1} parent=5 // pred_fallthru
        _
      %p180 = scmp.lt.s32.totalorder %s17, 2
      // Predicated region
      $region29: #{tpu_custom_call.1} parent=5 // pred_check
        %p181 = pneg %p180
      $region30: #{tpu_custom_call.1} parent=5 // pred_check_branch
        %183 = sbr.rel (%p181) target = $region32
      $region31: #{tpu_custom_call.1} parent=5 // pred_region
        // Predicated region
        $region33: #{tpu_custom_call.1} parent=31 // pred_check
          %p184 = pneg %p37
        $region34: #{tpu_custom_call.1} parent=31 // pred_check_branch
          %186 = sbr.rel (%p184) target = $region36
        $region35: #{tpu_custom_call.1} parent=31 // pred_region
          %s187 = sand.u32 %s27, 1
          %s188 = scalar_lea.sflag [#allocation3], %s187
          %s189 = sand.u32 %s27, 1
          %s190 = smul.addr %s189, 16
          %s191 = scalar_lea.vmem [#allocation2], %s190
          %s193 = ssub.s32 256, 256
          %194 = vsyncadd %s188, %s193
          %s195 = smul.addr %s17, 2
          %s196 = smul.addr %s195, 128
          %s197 = scalar_lea.hbm %s0, %s196
          %s199 = sshll.u32 %s191, 4
          %s200 = int_to_ptr.vmem [resolvable:$true] %s199
          %202 = dma.hbm_to_vmem [thread:$0]  %s197, 256, %s200, %s188
        $region36: #{tpu_custom_call.1} parent=31 // pred_fallthru
          _
      $region32: #{tpu_custom_call.1} parent=5 // pred_fallthru
        _
      %p203 = scmp.le.s32.totalorder 1, %s17
      %p204 = scmp.lt.s32.totalorder %s17, 3
      %p205 = pnand %p203, %p204
      %p206 = pneg %p205
      // Predicated region
      $region37: #{tpu_custom_call.1} parent=5 // pred_check
        _
      $region38: #{tpu_custom_call.1} parent=5 // pred_check_branch
        %208 = sbr.rel (%p205) target = $region40
      $region39: #{tpu_custom_call.1} parent=5 // pred_region
        %s209 = ssub.s32 %s17, 1
        %s210 = sand.u32 %s30, 1
        %s211 = scalar_lea.sflag [#allocation3], %s210
        %s212 = sand.u32 %s30, 1
        %s213 = smul.addr %s212, 16
        %s214 = scalar_lea.vmem [#allocation2], %s213
        // Predicated region
        $region41: #{tpu_custom_call.1} parent=39 // pred_check
          %p215 = pneg %p43
        $region42: #{tpu_custom_call.1} parent=39 // pred_check_branch
          %217 = sbr.rel (%p215) target = $region44
        $region43: #{tpu_custom_call.1} parent=39 // pred_region
          %218 = dma.done %s211, 256
        $region44: #{tpu_custom_call.1} parent=39 // pred_fallthru
          _
        %s219 = sand.u32 %s30, 1
        %s220 = scalar_lea.sflag [#allocation3], %s219
        %s221 = sand.u32 %s30, 1
        %s222 = smul.addr %s221, 16
        %s223 = scalar_lea.vmem [#allocation2], %s222
        %p224 = pneg %p43
        %p225 = pneg %p40
        %p226 = pneg %p64
        %p227 = pneg %p61
        %p228 = pneg %p85
        %p229 = pneg %p82
        %p230 = pneg %p106
        %p231 = pneg %p103
        %p232 = pneg %p127
        %p233 = pneg %p124
        %p234 = pneg %p153
        %p235 = pneg %p150
        %s236 = sand.u32 %s140, 1
        %s237 = scalar_lea.sflag [#allocation4], %s236
        %s238 = sand.u32 %s140, 1
        %s239 = smul.addr %s238, 16
        %s240 = scalar_lea.vmem [#allocation5], %s239
        %v241 = vld [vmem:[%s214] sm:$0xff]
        %v242 = vld [vmem:[%s214 + $0x8] sm:$0xff]
        %v243 = vadd.f32 %v241, %v242
        %244 = vadd.xlane.f32.xlu0 %v243
        %v245 = vpop.xlane.xlu0 %244
        %v246 = vrcp.pop 256.0
        %v247 = vmul.f32 %v245, %v246
        %v248 = vmax.f32 %v241, %v242
        %249 = vmax.xlane.f32.xlu0 %v248
        %v250 = vpop.xlane.xlu0 %249
        %vm251 = vcmask 7168
        %v252 = vsel %vm251, %v247, %v250
        %v253 = vld [vmem:[%s1] sm:$0x3]
        %v254 = vld [vmem:[%s2] sm:$0x3]
        %256 = vset.pattern.permute.xlu0 0
        %257 = vperm.xlu0 %256, %v254
        %v258 = vpop.permute.xlu0 %257
        %vm260 = vcmask 64512
        %v262 = vsel %vm260, %v253, 0
        %264 = vmatprep.subr.mxu0 0.0
        %265 = vmatpush1.msra.mxu0 %v252
        %266 = vmatprep.subr.mxu0 0.0
        %267 = vmatpush1.msra.mxu0 0.0
        %268 = vmatprep.subr.mxu0 0.0
        %269 = vmatpush1.msra.mxu0 0.0
        %270 = vmatprep.subr.mxu0 0.0
        %271 = vmatpush1.msra.mxu0 0.0
        %272 = vmatprep.subr.mxu0 0.0
        %273 = vmatpush1.msra.mxu0 0.0
        %274 = vmatprep.subr.mxu0 0.0
        %275 = vmatpush1.msra.mxu0 0.0
        %276 = vmatprep.subr.mxu0 0.0
        %277 = vmatpush1.msra.mxu0 0.0
        %278 = vmatprep.subr.mxu0 0.0
        %279 = vmatpush1.msra.mxu0 0.0
        %280 = vmatprep.subr.mxu0 0.0
        %281 = vmatpush1.msra.mxu0 0.0
        %282 = vmatprep.subr.mxu0 0.0
        %283 = vmatpush1.msra.mxu0 0.0
        %284 = vmatprep.subr.mxu0 0.0
        %285 = vmatpush1.msra.mxu0 0.0
        %286 = vmatprep.subr.mxu0 0.0
        %287 = vmatpush1.msra.mxu0 0.0
        %288 = vmatprep.subr.mxu0 0.0
        %289 = vmatpush1.msra.mxu0 0.0
        %290 = vmatprep.subr.mxu0 0.0
        %291 = vmatpush1.msra.mxu0 0.0
        %292 = vmatprep.subr.mxu0 0.0
        %293 = vmatpush1.msra.mxu0 0.0
        %294 = vmatprep.subr.mxu0 0.0
        %295 = vmatpush1.msra.mxu0 0.0
        %296 = vmatprep.subr.mxu0 0.0
        %297 = vmatpush1.msra.mxu0 0.0
        %298 = vmatprep.subr.mxu0 0.0
        %299 = vmatpush1.msra.mxu0 0.0
        %300 = vmatprep.subr.mxu0 0.0
        %301 = vmatpush1.msra.mxu0 0.0
        %302 = vmatprep.subr.mxu0 0.0
        %303 = vmatpush1.msra.mxu0 0.0
        %304 = vmatprep.subr.mxu0 0.0
        %305 = vmatpush1.msra.mxu0 0.0
        %306 = vmatprep.subr.mxu0 0.0
        %307 = vmatpush1.msra.mxu0 0.0
        %308 = vmatprep.subr.mxu0 0.0
        %309 = vmatpush1.msra.mxu0 0.0
        %310 = vmatprep.subr.mxu0 0.0
        %311 = vmatpush1.msra.mxu0 0.0
        %312 = vmatprep.subr.mxu0 0.0
        %313 = vmatpush1.msra.mxu0 0.0
        %314 = vmatprep.subr.mxu0 0.0
        %315 = vmatpush1.msra.mxu0 0.0
        %316 = vmatprep.subr.mxu0 0.0
        %317 = vmatpush1.msra.mxu0 0.0
        %318 = vmatprep.subr.mxu0 0.0
        %319 = vmatpush1.msra.mxu0 0.0
        %320 = vmatprep.subr.mxu0 0.0
        %321 = vmatpush1.msra.mxu0 0.0
        %322 = vmatprep.subr.mxu0 0.0
        %323 = vmatpush1.msra.mxu0 0.0
        %324 = vmatprep.subr.mxu0 0.0
        %325 = vmatpush1.msra.mxu0 0.0
        %326 = vmatprep.subr.mxu0 0.0
        %327 = vmatpush1.msra.mxu0 0.0
        %328 = vmatprep.mubr.f32.mxu0 0.0
        %329 = vmatmul.mubr.f32.gmra.mrb[0].mxu0 %v262
        %v330 = vpop.f32.mrb[0].mxu0
        %v331 = vadd.f32 %v258, %v330
        %v332 = vpop.f32.mrb[0].mxu0
        %333 = vdwg.mxu0
        %v334 = vmax.f32 %v331, 0.0
        %v335 = vld [vmem:[%s3] sm:$0xff]
        %v336 = vld [vmem:[%s4] sm:$0xff]
        %338 = vset.pattern.permute.xlu0 0
        %339 = vperm.xlu0 %338, %v336
        %v340 = vpop.permute.xlu0 %339
        %vm342 = vcmask 15360
        %v344 = vsel %vm342, %v335, 0
        %vm346 = vcmask 1041408
        %v348 = vsel %vm346, %v334, 0
        %350 = vmatprep.subr.mxu0 0.0
        %351 = vmatpush1.msra.mxu0 %v348
        %352 = vmatprep.subr.mxu0 0.0
        %353 = vmatpush1.msra.mxu0 0.0
        %354 = vmatprep.subr.mxu0 0.0
        %355 = vmatpush1.msra.mxu0 0.0
        %356 = vmatprep.subr.mxu0 0.0
        %357 = vmatpush1.msra.mxu0 0.0
        %358 = vmatprep.subr.mxu0 0.0
        %359 = vmatpush1.msra.mxu0 0.0
        %360 = vmatprep.subr.mxu0 0.0
        %361 = vmatpush1.msra.mxu0 0.0
        %362 = vmatprep.subr.mxu0 0.0
        %363 = vmatpush1.msra.mxu0 0.0
        %364 = vmatprep.subr.mxu0 0.0
        %365 = vmatpush1.msra.mxu0 0.0
        %366 = vmatprep.subr.mxu0 0.0
        %367 = vmatpush1.msra.mxu0 0.0
        %368 = vmatprep.subr.mxu0 0.0
        %369 = vmatpush1.msra.mxu0 0.0
        %370 = vmatprep.subr.mxu0 0.0
        %371 = vmatpush1.msra.mxu0 0.0
        %372 = vmatprep.subr.mxu0 0.0
        %373 = vmatpush1.msra.mxu0 0.0
        %374 = vmatprep.subr.mxu0 0.0
        %375 = vmatpush1.msra.mxu0 0.0
        %376 = vmatprep.subr.mxu0 0.0
        %377 = vmatpush1.msra.mxu0 0.0
        %378 = vmatprep.subr.mxu0 0.0
        %379 = vmatpush1.msra.mxu0 0.0
        %380 = vmatprep.subr.mxu0 0.0
        %381 = vmatpush1.msra.mxu0 0.0
        %382 = vmatprep.subr.mxu0 0.0
        %383 = vmatpush1.msra.mxu0 0.0
        %384 = vmatprep.subr.mxu0 0.0
        %385 = vmatpush1.msra.mxu0 0.0
        %386 = vmatprep.subr.mxu0 0.0
        %387 = vmatpush1.msra.mxu0 0.0
        %388 = vmatprep.subr.mxu0 0.0
        %389 = vmatpush1.msra.mxu0 0.0
        %390 = vmatprep.subr.mxu0 0.0
        %391 = vmatpush1.msra.mxu0 0.0
        %392 = vmatprep.subr.mxu0 0.0
        %393 = vmatpush1.msra.mxu0 0.0
        %394 = vmatprep.subr.mxu0 0.0
        %395 = vmatpush1.msra.mxu0 0.0
        %396 = vmatprep.subr.mxu0 0.0
        %397 = vmatpush1.msra.mxu0 0.0
        %398 = vmatprep.subr.mxu0 0.0
        %399 = vmatpush1.msra.mxu0 0.0
        %400 = vmatprep.subr.mxu0 0.0
        %401 = vmatpush1.msra.mxu0 0.0
        %402 = vmatprep.subr.mxu0 0.0
        %403 = vmatpush1.msra.mxu0 0.0
        %404 = vmatprep.subr.mxu0 0.0
        %405 = vmatpush1.msra.mxu0 0.0
        %406 = vmatprep.subr.mxu0 0.0
        %407 = vmatpush1.msra.mxu0 0.0
        %408 = vmatprep.subr.mxu0 0.0
        %409 = vmatpush1.msra.mxu0 0.0
        %410 = vmatprep.subr.mxu0 0.0
        %411 = vmatpush1.msra.mxu0 0.0
        %412 = vmatprep.subr.mxu0 0.0
        %413 = vmatpush1.msra.mxu0 0.0
        %414 = vmatprep.mubr.f32.mxu0 0.0
        %415 = vmatmul.mubr.f32.gmra.mrb[0].mxu0 %v344
        %v416 = vpop.f32.mrb[0].mxu0
        %v417 = vadd.f32 %v340, %v416
        %v418 = vpop.f32.mrb[0].mxu0
        %419 = vdwg.mxu0
        %421 = vrot.lane.b32.xlu0 %v417, 127
        %v422 = vpop.permute.xlu0 %421
        %v424 = vadd.f32 %v417, %v422
        %v425 = vxor.u32 %v424, 2147483648
        %v426 = vmul.f32 %v425, 1.442695
        %v427 = vpow.pop %v426
        %v428 = vadd.f32 %v427, 1.0
        %v429 = vrcp.pop %v428
        %v430 = vmul.f32 1.0, %v429
        %432 = vset.pattern.permute.xlu0 0
        %433 = vperm.xlu0 %432, %v430
        %v434 = vpop.permute.xlu0 %433
        %v436 = vmul.f32 %v241, %v434
        %v437 = vmul.f32 %v242, %v434
        %438 = vst [vmem:[%s240] sm:$0xff] %v436
        %439 = vst [vmem:[%s240 + $0x8] sm:$0xff] %v437
        %s440 = sand.u32 %s140, 1
        %s441 = scalar_lea.sflag [#allocation4], %s440
        %s442 = sand.u32 %s140, 1
        %s443 = smul.addr %s442, 16
        %s444 = scalar_lea.vmem [#allocation5], %s443
        // Predicated region
        $region45: #{tpu_custom_call.1} parent=39 // pred_check
          %p445 = pneg %p150
        $region46: #{tpu_custom_call.1} parent=39 // pred_check_branch
          %447 = sbr.rel (%p445) target = $region48
        $region47: #{tpu_custom_call.1} parent=39 // pred_region
          %s449 = ssub.s32 256, 256
          %450 = vsyncadd %s441, %s449
          %s451 = smul.addr %s22, 2
          %s452 = smul.addr %s451, 128
          %s453 = scalar_lea.hbm %s5, %s452
          %s455 = sshll.u32 %s444, 4
          %s456 = int_to_ptr.vmem [resolvable:$true] %s455
          %458 = dma.vmem_to_hbm [thread:$0]  %s456, 256, %s453, %s441
        $region48: #{tpu_custom_call.1} parent=39 // pred_fallthru
          _
      $region40: #{tpu_custom_call.1} parent=5 // pred_fallthru
        _
      %p459 = scmp.le.s32.totalorder 2, %s17
      // Predicated region
      $region49: #{tpu_custom_call.1} parent=5 // pred_check
        %p460 = pneg %p459
      $region50: #{tpu_custom_call.1} parent=5 // pred_check_branch
        %462 = sbr.rel (%p460) target = $region52
      $region51: #{tpu_custom_call.1} parent=5 // pred_region
        %s463 = ssub.s32 %s17, 2
        // Predicated region
        $region53: #{tpu_custom_call.1} parent=51 // pred_check
          %p464 = pneg %p156
        $region54: #{tpu_custom_call.1} parent=51 // pred_check_branch
          %466 = sbr.rel (%p464) target = $region56
        $region55: #{tpu_custom_call.1} parent=51 // pred_region
          %s467 = sand.u32 %s141, 1
          %s468 = scalar_lea.sflag [#allocation4], %s467
          %s469 = sand.u32 %s141, 1
          %s470 = smul.addr %s469, 16
          %s471 = scalar_lea.vmem [#allocation5], %s470
          %472 = dma.done %s468, 256
        $region56: #{tpu_custom_call.1} parent=51 // pred_fallthru
          _
      $region52: #{tpu_custom_call.1} parent=5 // pred_fallthru
        _
    $region6: #{tpu_custom_call.1} parent=1 // loop_footer
      %s21 = sadd.s32 1, %s17
    $region7: #{tpu_custom_call.1} parent=1 // loop_footer_branch
      %16 = sbr.rel target = $region3
    $region8: #{tpu_custom_call.1} parent=1 // loop_exit
      _
    %473 = vsyncpa [#allocation3], 1
    %s474 = scalar_lea.sflag [#allocation3], 1
    %475 = vsyncpa %s474, 1
    %476 = vsyncpa [#allocation4], 1
    %s477 = scalar_lea.sflag [#allocation4], 1
    %478 = vsyncpa %s477, 1

</llo_original>
